<compile_context>
chip_gen: v5e
topology: v5e:2x2
jax: 0.10.0
libtpu: 0.0.40
codegen_flags: <defaults>
</compile_context>

<pallas_src>
import functools

import jax
import jax.numpy as jnp
from jax import lax
from jax.experimental import pallas as pl
from jax.experimental.pallas import tpu as pltpu

_SUBLANE = 8  # f32 sublane granularity


def _lstm_kernel(x_ref, wih_ref, whh_ref, b_ref, wout_ref, bout_ref,
                 out_ref, xp_sc, *, seq_len, padded_batch, batch, hidden_size):
    """One grid step: hoisted input projection, unrolled recurrence, linear+relu."""
    # ---- Input projection hoisted out of the recurrence: one batched matmul ----
    # (T*Bp, F) x (F, 4H) -> (T*Bp, 4H); bias added once here, not per time step.
    xp_sc[...] = (
        jnp.dot(x_ref[...], wih_ref[...], preferred_element_type=jnp.float32)
        + b_ref[...]
    )

    H = hidden_size
    Bp = padded_batch
    whh = whh_ref[...]          # resident (H, 4H) weight; load hoisted out of loop

    def step(t, carry):
        h, c = carry
        # Rows [t*Bp : (t+1)*Bp] of the projection hold time step t (sublane-aligned).
        row0 = pl.multiple_of(t * Bp, _SUBLANE)
        gates = xp_sc[pl.ds(row0, Bp), :] + jnp.dot(
            h, whh, preferred_element_type=jnp.float32)          # (Bp, 4H)
        i_g = jax.nn.sigmoid(gates[:, 0 * H:1 * H])
        f_g = jax.nn.sigmoid(gates[:, 1 * H:2 * H])
        g_g = jnp.tanh(gates[:, 2 * H:3 * H])
        o_g = jax.nn.sigmoid(gates[:, 3 * H:4 * H])
        c_new = f_g * c + i_g * g_g
        h_new = o_g * jnp.tanh(c_new)
        return h_new, c_new

    h0 = jnp.zeros((Bp, H), jnp.float32)
    c0 = jnp.zeros((Bp, H), jnp.float32)
    # Short, static trip count -> fully unrolled for LLO scheduler visibility.
    h_last, _ = lax.fori_loop(0, seq_len, step, (h0, c0), unroll=True)

    # ---- Epilogue: Linear + ReLU on the last hidden state (padded rows dropped) ----
    y = (jnp.dot(h_last, wout_ref[...], preferred_element_type=jnp.float32)
         + bout_ref[...])
    out_ref[...] = jnp.maximum(y, 0.0)[:batch].astype(out_ref.dtype)


def lstm_forward(x_btf, params):
    """x_btf: (B, T, F) float32. Returns relu(linear(last_hidden)): (B, O)."""
    B, T, F = x_btf.shape
    H = params["whh_t"].shape[0]
    O = params["wout_t"].shape[1]

    # Pad batch to the sublane width so every per-step slice in the recurrence is
    # 8-row aligned (MXU granularity is >= 8 rows anyway, so padding is free).
    Bp = ((B + _SUBLANE - 1) // _SUBLANE) * _SUBLANE

    # Time-major, batch-padded, flattened: rows [t*Bp:(t+1)*Bp] = time step t.
    x_tbf = jnp.transpose(x_btf, (1, 0, 2))                  # (T, B, F)
    x_tbf = jnp.pad(x_tbf, ((0, 0), (0, Bp - B), (0, 0)))    # (T, Bp, F)
    x_2d = x_tbf.reshape(T * Bp, F)

    kernel = functools.partial(_lstm_kernel, seq_len=T, padded_batch=Bp,
                               batch=B, hidden_size=H)

    # TODO(synk): for production sizes (large T/H) chunk X along T with
    # emit_pipeline and add a batch grid axis marked "parallel" for v7x's 2 TCs;
    # bf16 MXU operands would also pay off there. Unnecessary at these shapes.
    return pl.pallas_call(
        kernel,
        out_shape=jax.ShapeDtypeStruct((B, O), jnp.float32),
        grid_spec=pltpu.PrefetchScalarGridSpec(
            num_scalar_prefetch=0,
            grid=(1,),                                         # single grid step
            in_specs=[
                pl.BlockSpec((T * Bp, F), lambda i: (0, 0)),   # X (time-major, flat)
                pl.BlockSpec((F, 4 * H), lambda i: (0, 0)),    # W_ih^T
                pl.BlockSpec((H, 4 * H), lambda i: (0, 0)),    # W_hh^T
                pl.BlockSpec((1, 4 * H), lambda i: (0, 0)),    # b_ih + b_hh
                pl.BlockSpec((H, O), lambda i: (0, 0)),        # W_lin^T
                pl.BlockSpec((1, O), lambda i: (0, 0)),        # b_lin
            ],
            out_specs=pl.BlockSpec((B, O), lambda i: (0, 0)),
            scratch_shapes=[
                pltpu.VMEM((T * Bp, 4 * H), jnp.float32),      # precomputed x-projection
            ],
        ),
        compiler_params=pltpu.CompilerParams(
            dimension_semantics=("arbitrary",)),
    )(x_2d, params["wih_t"], params["whh_t"], params["bias"],
      params["wout_t"], params["bout"])


def init_params(key, input_size, hidden_size, output_size):
    """Deterministic synthetic params, PyTorch-style uniform init U(-1/sqrt(H), 1/sqrt(H))."""
    ks = jax.random.split(key, 6)
    k = 1.0 / jnp.sqrt(jnp.float32(hidden_size))
    u = lambda kk, shape: jax.random.uniform(kk, shape, jnp.float32, -k, k)
    w_ih = u(ks[0], (4 * hidden_size, input_size))   # PyTorch weight_ih_l0
    w_hh = u(ks[1], (4 * hidden_size, hidden_size))  # PyTorch weight_hh_l0
    b_ih = u(ks[2], (4 * hidden_size,))
    b_hh = u(ks[3], (4 * hidden_size,))
    w_lin = u(ks[4], (output_size, hidden_size))     # nn.Linear weight
    b_lin = u(ks[5], (output_size,))
    return {
        "wih_t": w_ih.T,                                  # (F, 4H)
        "whh_t": w_hh.T,                                  # (H, 4H)
        "bias": (b_ih + b_hh).reshape(1, 4 * hidden_size),
        "wout_t": w_lin.T,                                # (H, O)
        "bout": b_lin.reshape(1, output_size),
    }


def lstm_reference(x_btf, params):
    """Pure-JAX reference for a sanity check."""
    B, T, F = x_btf.shape
    H = params["whh_t"].shape[0]
    h = jnp.zeros((B, H), jnp.float32)
    c = jnp.zeros((B, H), jnp.float32)
    for t in range(T):
        g = x_btf[:, t, :] @ params["wih_t"] + h @ params["whh_t"] + params["bias"]
        i = jax.nn.sigmoid(g[:, 0 * H:1 * H])
        f = jax.nn.sigmoid(g[:, 1 * H:2 * H])
        gg = jnp.tanh(g[:, 2 * H:3 * H])
        o = jax.nn.sigmoid(g[:, 3 * H:4 * H])
        c = f * c + i * gg
        h = o * jnp.tanh(c)
    return jnp.maximum(h @ params["wout_t"] + params["bout"], 0.0)


if __name__ == "__main__":
    B, T, F, H, O = 2, 8, 16, 32, 8   # hidden_size=32 fixed by the module's default h

    key = jax.random.PRNGKey(0)
    kx, kp = jax.random.split(key)
    x = jax.random.normal(kx, (B, T, F), jnp.float32)
    params = init_params(kp, F, H, O)

    out = lstm_forward(x, params)
    out = jax.block_until_ready(out)

    ref = lstm_reference(x, params)
    assert out.shape == (B, O)
    assert jnp.allclose(out, ref, atol=1e-5, rtol=1e-5), (out, ref)

    print("KERNEL_OK")
</pallas_src>

<mosaic_0001>
module attributes {stable_mosaic.version = 11 : i64} {
  func.func @_lstm_kernel(%arg0: i32, %arg1: memref<64x16xf32, #tpu.memory_space<vmem>>, %arg2: memref<16x128xf32, #tpu.memory_space<vmem>>, %arg3: memref<32x128xf32, #tpu.memory_space<vmem>>, %arg4: memref<1x128xf32, #tpu.memory_space<vmem>>, %arg5: memref<32x8xf32, #tpu.memory_space<vmem>>, %arg6: memref<1x8xf32, #tpu.memory_space<vmem>>, %arg7: memref<2x8xf32, #tpu.memory_space<vmem>>, %arg8: memref<64x128xf32, #tpu.memory_space<vmem>>) attributes {dimension_semantics = [#tpu.dimension_semantics<arbitrary>], iteration_bounds = array<i64: 1>, scalar_prefetch = 0 : i64, scratch_operands = 1 : i64, tpu.core_type = #tpu.core_type<tc>, window_params = [{pipeline_mode = #tpu.pipeline_mode<synchronous>, transform_indices = @transform_0, window_bounds = array<i64: 64, 16>}, {pipeline_mode = #tpu.pipeline_mode<synchronous>, transform_indices = @transform_1, window_bounds = array<i64: 16, 128>}, {pipeline_mode = #tpu.pipeline_mode<synchronous>, transform_indices = @transform_2, window_bounds = array<i64: 32, 128>}, {pipeline_mode = #tpu.pipeline_mode<synchronous>, transform_indices = @transform_3, window_bounds = array<i64: 1, 128>}, {pipeline_mode = #tpu.pipeline_mode<synchronous>, transform_indices = @transform_4, window_bounds = array<i64: 32, 8>}, {pipeline_mode = #tpu.pipeline_mode<synchronous>, transform_indices = @transform_5, window_bounds = array<i64: 1, 8>}, {pipeline_mode = #tpu.pipeline_mode<synchronous>, transform_indices = @transform_6, window_bounds = array<i64: 2, 8>}]} {
    %c0 = arith.constant 0 : index
    %c0_0 = arith.constant 0 : index
    %0 = vector.load %arg1[%c0, %c0_0] : memref<64x16xf32, #tpu.memory_space<vmem>>, vector<64x16xf32>
    %c0_1 = arith.constant 0 : index
    %c0_2 = arith.constant 0 : index
    %1 = vector.load %arg2[%c0_1, %c0_2] : memref<16x128xf32, #tpu.memory_space<vmem>>, vector<16x128xf32>
    %cst = arith.constant dense<0.000000e+00> : vector<64x128xf32>
    %2 = tpu.matmul %0, %1, %cst {dimension_numbers = #tpu.dot_dimension_numbers<[1], [0], [0], [1], [0, 0, 1, 1], [], []>} : vector<64x16xf32>, vector<16x128xf32>, vector<64x128xf32> -> vector<64x128xf32>
    %c0_3 = arith.constant 0 : index
    %c0_4 = arith.constant 0 : index
    %3 = vector.load %arg4[%c0_3, %c0_4] : memref<1x128xf32, #tpu.memory_space<vmem>>, vector<1x128xf32>
    %4 = vector.broadcast %3 : vector<1x128xf32> to vector<64x128xf32>
    %5 = arith.addf %2, %4 : vector<64x128xf32>
    %c0_5 = arith.constant 0 : index
    %c0_6 = arith.constant 0 : index
    %6 = vector.load %arg8[%c0_5, %c0_6] : memref<64x128xf32, #tpu.memory_space<vmem>>, vector<64x128xf32>
    tpu.vector_store %arg8[%c0_5, %c0_6], %5 {strides = array<i32>} : memref<64x128xf32, #tpu.memory_space<vmem>>, vector<64x128xf32>,
    %c0_7 = arith.constant 0 : index
    %c0_8 = arith.constant 0 : index
    %7 = vector.load %arg3[%c0_7, %c0_8] : memref<32x128xf32, #tpu.memory_space<vmem>>, vector<32x128xf32>
    %cst_9 = arith.constant 0.000000e+00 : f32
    %8 = vector.broadcast %cst_9 : f32 to vector<8x32xf32>
    %cst_10 = arith.constant 0.000000e+00 : f32
    %9 = vector.broadcast %cst_10 : f32 to vector<8x32xf32>
    %c0_i32 = arith.constant 0 : i32
    %c8_i32 = arith.constant 8 : i32
    %10 = arith.muli %c0_i32, %c8_i32 : i32
    %11 = tpu.assume_multiple %10, 8 : i32
    %12 = arith.index_cast %11 : i32 to index
    %c0_11 = arith.constant 0 : index
    %13 = vector.load %arg8[%12, %c0_11] : memref<64x128xf32, #tpu.memory_space<vmem>>, vector<8x128xf32>
    %cst_12 = arith.constant dense<0.000000e+00> : vector<8x128xf32>
    %14 = tpu.matmul %8, %7, %cst_12 {dimension_numbers = #tpu.dot_dimension_numbers<[1], [0], [0], [1], [0, 0, 1, 1], [], []>} : vector<8x32xf32>, vector<32x128xf32>, vector<8x128xf32> -> vector<8x128xf32>
    %15 = arith.addf %13, %14 : vector<8x128xf32>
    %16 = vector.extract_strided_slice %15 {offsets = [0, 0], sizes = [8, 32], strides = [1, 1]} : vector<8x128xf32> to vector<8x32xf32>
    %17 = arith.negf %16 : vector<8x32xf32>
    %18 = math.exp %17 : vector<8x32xf32>
    %cst_13 = arith.constant 1.000000e+00 : f32
    %19 = vector.broadcast %cst_13 : f32 to vector<8x32xf32>
    %20 = arith.addf %19, %18 : vector<8x32xf32>
    %21 = arith.divf %19, %20 : vector<8x32xf32>
    %22 = vector.extract_strided_slice %15 {offsets = [0, 32], sizes = [8, 32], strides = [1, 1]} : vector<8x128xf32> to vector<8x32xf32>
    %23 = arith.negf %22 : vector<8x32xf32>
    %24 = math.exp %23 : vector<8x32xf32>
    %cst_14 = arith.constant 1.000000e+00 : f32
    %25 = vector.broadcast %cst_14 : f32 to vector<8x32xf32>
    %26 = arith.addf %25, %24 : vector<8x32xf32>
    %27 = arith.divf %25, %26 : vector<8x32xf32>
    %28 = vector.extract_strided_slice %15 {offsets = [0, 64], sizes = [8, 32], strides = [1, 1]} : vector<8x128xf32> to vector<8x32xf32>
    %29 = math.tanh %28 : vector<8x32xf32>
    %30 = vector.extract_strided_slice %15 {offsets = [0, 96], sizes = [8, 32], strides = [1, 1]} : vector<8x128xf32> to vector<8x32xf32>
    %31 = arith.negf %30 : vector<8x32xf32>
    %32 = math.exp %31 : vector<8x32xf32>
    %cst_15 = arith.constant 1.000000e+00 : f32
    %33 = vector.broadcast %cst_15 : f32 to vector<8x32xf32>
    %34 = arith.addf %33, %32 : vector<8x32xf32>
    %35 = arith.divf %33, %34 : vector<8x32xf32>
    %36 = arith.mulf %27, %9 : vector<8x32xf32>
    %37 = arith.mulf %21, %29 : vector<8x32xf32>
    %38 = arith.addf %36, %37 : vector<8x32xf32>
    %39 = math.tanh %38 : vector<8x32xf32>
    %40 = arith.mulf %35, %39 : vector<8x32xf32>
    %c1_i32 = arith.constant 1 : i32
    %c8_i32_16 = arith.constant 8 : i32
    %41 = arith.muli %c1_i32, %c8_i32_16 : i32
    %42 = tpu.assume_multiple %41, 8 : i32
    %43 = arith.index_cast %42 : i32 to index
    %c0_17 = arith.constant 0 : index
    %44 = vector.load %arg8[%43, %c0_17] : memref<64x128xf32, #tpu.memory_space<vmem>>, vector<8x128xf32>
    %cst_18 = arith.constant dense<0.000000e+00> : vector<8x128xf32>
    %45 = tpu.matmul %40, %7, %cst_18 {dimension_numbers = #tpu.dot_dimension_numbers<[1], [0], [0], [1], [0, 0, 1, 1], [], []>} : vector<8x32xf32>, vector<32x128xf32>, vector<8x128xf32> -> vector<8x128xf32>
    %46 = arith.addf %44, %45 : vector<8x128xf32>
    %47 = vector.extract_strided_slice %46 {offsets = [0, 0], sizes = [8, 32], strides = [1, 1]} : vector<8x128xf32> to vector<8x32xf32>
    %48 = arith.negf %47 : vector<8x32xf32>
    %49 = math.exp %48 : vector<8x32xf32>
    %cst_19 = arith.constant 1.000000e+00 : f32
    %50 = vector.broadcast %cst_19 : f32 to vector<8x32xf32>
    %51 = arith.addf %50, %49 : vector<8x32xf32>
    %52 = arith.divf %50, %51 : vector<8x32xf32>
    %53 = vector.extract_strided_slice %46 {offsets = [0, 32], sizes = [8, 32], strides = [1, 1]} : vector<8x128xf32> to vector<8x32xf32>
    %54 = arith.negf %53 : vector<8x32xf32>
    %55 = math.exp %54 : vector<8x32xf32>
    %cst_20 = arith.constant 1.000000e+00 : f32
    %56 = vector.broadcast %cst_20 : f32 to vector<8x32xf32>
    %57 = arith.addf %56, %55 : vector<8x32xf32>
    %58 = arith.divf %56, %57 : vector<8x32xf32>
    %59 = vector.extract_strided_slice %46 {offsets = [0, 64], sizes = [8, 32], strides = [1, 1]} : vector<8x128xf32> to vector<8x32xf32>
    %60 = math.tanh %59 : vector<8x32xf32>
    %61 = vector.extract_strided_slice %46 {offsets = [0, 96], sizes = [8, 32], strides = [1, 1]} : vector<8x128xf32> to vector<8x32xf32>
    %62 = arith.negf %61 : vector<8x32xf32>
    %63 = math.exp %62 : vector<8x32xf32>
    %cst_21 = arith.constant 1.000000e+00 : f32
    %64 = vector.broadcast %cst_21 : f32 to vector<8x32xf32>
    %65 = arith.addf %64, %63 : vector<8x32xf32>
    %66 = arith.divf %64, %65 : vector<8x32xf32>
    %67 = arith.mulf %58, %38 : vector<8x32xf32>
    %68 = arith.mulf %52, %60 : vector<8x32xf32>
    %69 = arith.addf %67, %68 : vector<8x32xf32>
    %70 = math.tanh %69 : vector<8x32xf32>
    %71 = arith.mulf %66, %70 : vector<8x32xf32>
    %c2_i32 = arith.constant 2 : i32
    %c8_i32_22 = arith.constant 8 : i32
    %72 = arith.muli %c2_i32, %c8_i32_22 : i32
    %73 = tpu.assume_multiple %72, 8 : i32
    %74 = arith.index_cast %73 : i32 to index
    %c0_23 = arith.constant 0 : index
    %75 = vector.load %arg8[%74, %c0_23] : memref<64x128xf32, #tpu.memory_space<vmem>>, vector<8x128xf32>
    %cst_24 = arith.constant dense<0.000000e+00> : vector<8x128xf32>
    %76 = tpu.matmul %71, %7, %cst_24 {dimension_numbers = #tpu.dot_dimension_numbers<[1], [0], [0], [1], [0, 0, 1, 1], [], []>} : vector<8x32xf32>, vector<32x128xf32>, vector<8x128xf32> -> vector<8x128xf32>
    %77 = arith.addf %75, %76 : vector<8x128xf32>
    %78 = vector.extract_strided_slice %77 {offsets = [0, 0], sizes = [8, 32], strides = [1, 1]} : vector<8x128xf32> to vector<8x32xf32>
    %79 = arith.negf %78 : vector<8x32xf32>
    %80 = math.exp %79 : vector<8x32xf32>
    %cst_25 = arith.constant 1.000000e+00 : f32
    %81 = vector.broadcast %cst_25 : f32 to vector<8x32xf32>
    %82 = arith.addf %81, %80 : vector<8x32xf32>
    %83 = arith.divf %81, %82 : vector<8x32xf32>
    %84 = vector.extract_strided_slice %77 {offsets = [0, 32], sizes = [8, 32], strides = [1, 1]} : vector<8x128xf32> to vector<8x32xf32>
    %85 = arith.negf %84 : vector<8x32xf32>
    %86 = math.exp %85 : vector<8x32xf32>
    %cst_26 = arith.constant 1.000000e+00 : f32
    %87 = vector.broadcast %cst_26 : f32 to vector<8x32xf32>
    %88 = arith.addf %87, %86 : vector<8x32xf32>
    %89 = arith.divf %87, %88 : vector<8x32xf32>
    %90 = vector.extract_strided_slice %77 {offsets = [0, 64], sizes = [8, 32], strides = [1, 1]} : vector<8x128xf32> to vector<8x32xf32>
    %91 = math.tanh %90 : vector<8x32xf32>
    %92 = vector.extract_strided_slice %77 {offsets = [0, 96], sizes = [8, 32], strides = [1, 1]} : vector<8x128xf32> to vector<8x32xf32>
    %93 = arith.negf %92 : vector<8x32xf32>
    %94 = math.exp %93 : vector<8x32xf32>
    %cst_27 = arith.constant 1.000000e+00 : f32
    %95 = vector.broadcast %cst_27 : f32 to vector<8x32xf32>
    %96 = arith.addf %95, %94 : vector<8x32xf32>
    %97 = arith.divf %95, %96 : vector<8x32xf32>
    %98 = arith.mulf %89, %69 : vector<8x32xf32>
    %99 = arith.mulf %83, %91 : vector<8x32xf32>
    %100 = arith.addf %98, %99 : vector<8x32xf32>
    %101 = math.tanh %100 : vector<8x32xf32>
    %102 = arith.mulf %97, %101 : vector<8x32xf32>
    %c3_i32 = arith.constant 3 : i32
    %c8_i32_28 = arith.constant 8 : i32
    %103 = arith.muli %c3_i32, %c8_i32_28 : i32
    %104 = tpu.assume_multiple %103, 8 : i32
    %105 = arith.index_cast %104 : i32 to index
    %c0_29 = arith.constant 0 : index
    %106 = vector.load %arg8[%105, %c0_29] : memref<64x128xf32, #tpu.memory_space<vmem>>, vector<8x128xf32>
    %cst_30 = arith.constant dense<0.000000e+00> : vector<8x128xf32>
    %107 = tpu.matmul %102, %7, %cst_30 {dimension_numbers = #tpu.dot_dimension_numbers<[1], [0], [0], [1], [0, 0, 1, 1], [], []>} : vector<8x32xf32>, vector<32x128xf32>, vector<8x128xf32> -> vector<8x128xf32>
    %108 = arith.addf %106, %107 : vector<8x128xf32>
    %109 = vector.extract_strided_slice %108 {offsets = [0, 0], sizes = [8, 32], strides = [1, 1]} : vector<8x128xf32> to vector<8x32xf32>
    %110 = arith.negf %109 : vector<8x32xf32>
    %111 = math.exp %110 : vector<8x32xf32>
    %cst_31 = arith.constant 1.000000e+00 : f32
    %112 = vector.broadcast %cst_31 : f32 to vector<8x32xf32>
    %113 = arith.addf %112, %111 : vector<8x32xf32>
    %114 = arith.divf %112, %113 : vector<8x32xf32>
    %115 = vector.extract_strided_slice %108 {offsets = [0, 32], sizes = [8, 32], strides = [1, 1]} : vector<8x128xf32> to vector<8x32xf32>
    %116 = arith.negf %115 : vector<8x32xf32>
    %117 = math.exp %116 : vector<8x32xf32>
    %cst_32 = arith.constant 1.000000e+00 : f32
    %118 = vector.broadcast %cst_32 : f32 to vector<8x32xf32>
    %119 = arith.addf %118, %117 : vector<8x32xf32>
    %120 = arith.divf %118, %119 : vector<8x32xf32>
    %121 = vector.extract_strided_slice %108 {offsets = [0, 64], sizes = [8, 32], strides = [1, 1]} : vector<8x128xf32> to vector<8x32xf32>
    %122 = math.tanh %121 : vector<8x32xf32>
    %123 = vector.extract_strided_slice %108 {offsets = [0, 96], sizes = [8, 32], strides = [1, 1]} : vector<8x128xf32> to vector<8x32xf32>
    %124 = arith.negf %123 : vector<8x32xf32>
    %125 = math.exp %124 : vector<8x32xf32>
    %cst_33 = arith.constant 1.000000e+00 : f32
    %126 = vector.broadcast %cst_33 : f32 to vector<8x32xf32>
    %127 = arith.addf %126, %125 : vector<8x32xf32>
    %128 = arith.divf %126, %127 : vector<8x32xf32>
    %129 = arith.mulf %120, %100 : vector<8x32xf32>
    %130 = arith.mulf %114, %122 : vector<8x32xf32>
    %131 = arith.addf %129, %130 : vector<8x32xf32>
    %132 = math.tanh %131 : vector<8x32xf32>
    %133 = arith.mulf %128, %132 : vector<8x32xf32>
    %c4_i32 = arith.constant 4 : i32
    %c8_i32_34 = arith.constant 8 : i32
    %134 = arith.muli %c4_i32, %c8_i32_34 : i32
    %135 = tpu.assume_multiple %134, 8 : i32
    %136 = arith.index_cast %135 : i32 to index
    %c0_35 = arith.constant 0 : index
    %137 = vector.load %arg8[%136, %c0_35] : memref<64x128xf32, #tpu.memory_space<vmem>>, vector<8x128xf32>
    %cst_36 = arith.constant dense<0.000000e+00> : vector<8x128xf32>
    %138 = tpu.matmul %133, %7, %cst_36 {dimension_numbers = #tpu.dot_dimension_numbers<[1], [0], [0], [1], [0, 0, 1, 1], [], []>} : vector<8x32xf32>, vector<32x128xf32>, vector<8x128xf32> -> vector<8x128xf32>
    %139 = arith.addf %137, %138 : vector<8x128xf32>
    %140 = vector.extract_strided_slice %139 {offsets = [0, 0], sizes = [8, 32], strides = [1, 1]} : vector<8x128xf32> to vector<8x32xf32>
    %141 = arith.negf %140 : vector<8x32xf32>
    %142 = math.exp %141 : vector<8x32xf32>
    %cst_37 = arith.constant 1.000000e+00 : f32
    %143 = vector.broadcast %cst_37 : f32 to vector<8x32xf32>
    %144 = arith.addf %143, %142 : vector<8x32xf32>
    %145 = arith.divf %143, %144 : vector<8x32xf32>
    %146 = vector.extract_strided_slice %139 {offsets = [0, 32], sizes = [8, 32], strides = [1, 1]} : vector<8x128xf32> to vector<8x32xf32>
    %147 = arith.negf %146 : vector<8x32xf32>
    %148 = math.exp %147 : vector<8x32xf32>
    %cst_38 = arith.constant 1.000000e+00 : f32
    %149 = vector.broadcast %cst_38 : f32 to vector<8x32xf32>
    %150 = arith.addf %149, %148 : vector<8x32xf32>
    %151 = arith.divf %149, %150 : vector<8x32xf32>
    %152 = vector.extract_strided_slice %139 {offsets = [0, 64], sizes = [8, 32], strides = [1, 1]} : vector<8x128xf32> to vector<8x32xf32>
    %153 = math.tanh %152 : vector<8x32xf32>
    %154 = vector.extract_strided_slice %139 {offsets = [0, 96], sizes = [8, 32], strides = [1, 1]} : vector<8x128xf32> to vector<8x32xf32>
    %155 = arith.negf %154 : vector<8x32xf32>
    %156 = math.exp %155 : vector<8x32xf32>
    %cst_39 = arith.constant 1.000000e+00 : f32
    %157 = vector.broadcast %cst_39 : f32 to vector<8x32xf32>
    %158 = arith.addf %157, %156 : vector<8x32xf32>
    %159 = arith.divf %157, %158 : vector<8x32xf32>
    %160 = arith.mulf %151, %131 : vector<8x32xf32>
    %161 = arith.mulf %145, %153 : vector<8x32xf32>
    %162 = arith.addf %160, %161 : vector<8x32xf32>
    %163 = math.tanh %162 : vector<8x32xf32>
    %164 = arith.mulf %159, %163 : vector<8x32xf32>
    %c5_i32 = arith.constant 5 : i32
    %c8_i32_40 = arith.constant 8 : i32
    %165 = arith.muli %c5_i32, %c8_i32_40 : i32
    %166 = tpu.assume_multiple %165, 8 : i32
    %167 = arith.index_cast %166 : i32 to index
    %c0_41 = arith.constant 0 : index
    %168 = vector.load %arg8[%167, %c0_41] : memref<64x128xf32, #tpu.memory_space<vmem>>, vector<8x128xf32>
    %cst_42 = arith.constant dense<0.000000e+00> : vector<8x128xf32>
    %169 = tpu.matmul %164, %7, %cst_42 {dimension_numbers = #tpu.dot_dimension_numbers<[1], [0], [0], [1], [0, 0, 1, 1], [], []>} : vector<8x32xf32>, vector<32x128xf32>, vector<8x128xf32> -> vector<8x128xf32>
    %170 = arith.addf %168, %169 : vector<8x128xf32>
    %171 = vector.extract_strided_slice %170 {offsets = [0, 0], sizes = [8, 32], strides = [1, 1]} : vector<8x128xf32> to vector<8x32xf32>
    %172 = arith.negf %171 : vector<8x32xf32>
    %173 = math.exp %172 : vector<8x32xf32>
    %cst_43 = arith.constant 1.000000e+00 : f32
    %174 = vector.broadcast %cst_43 : f32 to vector<8x32xf32>
    %175 = arith.addf %174, %173 : vector<8x32xf32>
    %176 = arith.divf %174, %175 : vector<8x32xf32>
    %177 = vector.extract_strided_slice %170 {offsets = [0, 32], sizes = [8, 32], strides = [1, 1]} : vector<8x128xf32> to vector<8x32xf32>
    %178 = arith.negf %177 : vector<8x32xf32>
    %179 = math.exp %178 : vector<8x32xf32>
    %cst_44 = arith.constant 1.000000e+00 : f32
    %180 = vector.broadcast %cst_44 : f32 to vector<8x32xf32>
    %181 = arith.addf %180, %179 : vector<8x32xf32>
    %182 = arith.divf %180, %181 : vector<8x32xf32>
    %183 = vector.extract_strided_slice %170 {offsets = [0, 64], sizes = [8, 32], strides = [1, 1]} : vector<8x128xf32> to vector<8x32xf32>
    %184 = math.tanh %183 : vector<8x32xf32>
    %185 = vector.extract_strided_slice %170 {offsets = [0, 96], sizes = [8, 32], strides = [1, 1]} : vector<8x128xf32> to vector<8x32xf32>
    %186 = arith.negf %185 : vector<8x32xf32>
    %187 = math.exp %186 : vector<8x32xf32>
    %cst_45 = arith.constant 1.000000e+00 : f32
    %188 = vector.broadcast %cst_45 : f32 to vector<8x32xf32>
    %189 = arith.addf %188, %187 : vector<8x32xf32>
    %190 = arith.divf %188, %189 : vector<8x32xf32>
    %191 = arith.mulf %182, %162 : vector<8x32xf32>
    %192 = arith.mulf %176, %184 : vector<8x32xf32>
    %193 = arith.addf %191, %192 : vector<8x32xf32>
    %194 = math.tanh %193 : vector<8x32xf32>
    %195 = arith.mulf %190, %194 : vector<8x32xf32>
    %c6_i32 = arith.constant 6 : i32
    %c8_i32_46 = arith.constant 8 : i32
    %196 = arith.muli %c6_i32, %c8_i32_46 : i32
    %197 = tpu.assume_multiple %196, 8 : i32
    %198 = arith.index_cast %197 : i32 to index
    %c0_47 = arith.constant 0 : index
    %199 = vector.load %arg8[%198, %c0_47] : memref<64x128xf32, #tpu.memory_space<vmem>>, vector<8x128xf32>
    %cst_48 = arith.constant dense<0.000000e+00> : vector<8x128xf32>
    %200 = tpu.matmul %195, %7, %cst_48 {dimension_numbers = #tpu.dot_dimension_numbers<[1], [0], [0], [1], [0, 0, 1, 1], [], []>} : vector<8x32xf32>, vector<32x128xf32>, vector<8x128xf32> -> vector<8x128xf32>
    %201 = arith.addf %199, %200 : vector<8x128xf32>
    %202 = vector.extract_strided_slice %201 {offsets = [0, 0], sizes = [8, 32], strides = [1, 1]} : vector<8x128xf32> to vector<8x32xf32>
    %203 = arith.negf %202 : vector<8x32xf32>
    %204 = math.exp %203 : vector<8x32xf32>
    %cst_49 = arith.constant 1.000000e+00 : f32
    %205 = vector.broadcast %cst_49 : f32 to vector<8x32xf32>
    %206 = arith.addf %205, %204 : vector<8x32xf32>
    %207 = arith.divf %205, %206 : vector<8x32xf32>
    %208 = vector.extract_strided_slice %201 {offsets = [0, 32], sizes = [8, 32], strides = [1, 1]} : vector<8x128xf32> to vector<8x32xf32>
    %209 = arith.negf %208 : vector<8x32xf32>
    %210 = math.exp %209 : vector<8x32xf32>
    %cst_50 = arith.constant 1.000000e+00 : f32
    %211 = vector.broadcast %cst_50 : f32 to vector<8x32xf32>
    %212 = arith.addf %211, %210 : vector<8x32xf32>
    %213 = arith.divf %211, %212 : vector<8x32xf32>
    %214 = vector.extract_strided_slice %201 {offsets = [0, 64], sizes = [8, 32], strides = [1, 1]} : vector<8x128xf32> to vector<8x32xf32>
    %215 = math.tanh %214 : vector<8x32xf32>
    %216 = vector.extract_strided_slice %201 {offsets = [0, 96], sizes = [8, 32], strides = [1, 1]} : vector<8x128xf32> to vector<8x32xf32>
    %217 = arith.negf %216 : vector<8x32xf32>
    %218 = math.exp %217 : vector<8x32xf32>
    %cst_51 = arith.constant 1.000000e+00 : f32
    %219 = vector.broadcast %cst_51 : f32 to vector<8x32xf32>
    %220 = arith.addf %219, %218 : vector<8x32xf32>
    %221 = arith.divf %219, %220 : vector<8x32xf32>
    %222 = arith.mulf %213, %193 : vector<8x32xf32>
    %223 = arith.mulf %207, %215 : vector<8x32xf32>
    %224 = arith.addf %222, %223 : vector<8x32xf32>
    %225 = math.tanh %224 : vector<8x32xf32>
    %226 = arith.mulf %221, %225 : vector<8x32xf32>
    %c7_i32 = arith.constant 7 : i32
    %c8_i32_52 = arith.constant 8 : i32
    %227 = arith.muli %c7_i32, %c8_i32_52 : i32
    %228 = tpu.assume_multiple %227, 8 : i32
    %229 = arith.index_cast %228 : i32 to index
    %c0_53 = arith.constant 0 : index
    %230 = vector.load %arg8[%229, %c0_53] : memref<64x128xf32, #tpu.memory_space<vmem>>, vector<8x128xf32>
    %cst_54 = arith.constant dense<0.000000e+00> : vector<8x128xf32>
    %231 = tpu.matmul %226, %7, %cst_54 {dimension_numbers = #tpu.dot_dimension_numbers<[1], [0], [0], [1], [0, 0, 1, 1], [], []>} : vector<8x32xf32>, vector<32x128xf32>, vector<8x128xf32> -> vector<8x128xf32>
    %232 = arith.addf %230, %231 : vector<8x128xf32>
    %233 = vector.extract_strided_slice %232 {offsets = [0, 0], sizes = [8, 32], strides = [1, 1]} : vector<8x128xf32> to vector<8x32xf32>
    %234 = arith.negf %233 : vector<8x32xf32>
    %235 = math.exp %234 : vector<8x32xf32>
    %cst_55 = arith.constant 1.000000e+00 : f32
    %236 = vector.broadcast %cst_55 : f32 to vector<8x32xf32>
    %237 = arith.addf %236, %235 : vector<8x32xf32>
    %238 = arith.divf %236, %237 : vector<8x32xf32>
    %239 = vector.extract_strided_slice %232 {offsets = [0, 32], sizes = [8, 32], strides = [1, 1]} : vector<8x128xf32> to vector<8x32xf32>
    %240 = arith.negf %239 : vector<8x32xf32>
    %241 = math.exp %240 : vector<8x32xf32>
    %cst_56 = arith.constant 1.000000e+00 : f32
    %242 = vector.broadcast %cst_56 : f32 to vector<8x32xf32>
    %243 = arith.addf %242, %241 : vector<8x32xf32>
    %244 = arith.divf %242, %243 : vector<8x32xf32>
    %245 = vector.extract_strided_slice %232 {offsets = [0, 64], sizes = [8, 32], strides = [1, 1]} : vector<8x128xf32> to vector<8x32xf32>
    %246 = math.tanh %245 : vector<8x32xf32>
    %247 = vector.extract_strided_slice %232 {offsets = [0, 96], sizes = [8, 32], strides = [1, 1]} : vector<8x128xf32> to vector<8x32xf32>
    %248 = arith.negf %247 : vector<8x32xf32>
    %249 = math.exp %248 : vector<8x32xf32>
    %cst_57 = arith.constant 1.000000e+00 : f32
    %250 = vector.broadcast %cst_57 : f32 to vector<8x32xf32>
    %251 = arith.addf %250, %249 : vector<8x32xf32>
    %252 = arith.divf %250, %251 : vector<8x32xf32>
    %253 = arith.mulf %244, %224 : vector<8x32xf32>
    %254 = arith.mulf %238, %246 : vector<8x32xf32>
    %255 = arith.addf %253, %254 : vector<8x32xf32>
    %256 = math.tanh %255 : vector<8x32xf32>
    %257 = arith.mulf %252, %256 : vector<8x32xf32>
    %c8_i32_58 = arith.constant 8 : i32
    %c0_59 = arith.constant 0 : index
    %c0_60 = arith.constant 0 : index
    %258 = vector.load %arg5[%c0_59, %c0_60] : memref<32x8xf32, #tpu.memory_space<vmem>>, vector<32x8xf32>
    %cst_61 = arith.constant dense<0.000000e+00> : vector<8x8xf32>
    %259 = tpu.matmul %257, %258, %cst_61 {dimension_numbers = #tpu.dot_dimension_numbers<[1], [0], [0], [1], [0, 0, 1, 1], [], []>} : vector<8x32xf32>, vector<32x8xf32>, vector<8x8xf32> -> vector<8x8xf32>
    %c0_62 = arith.constant 0 : index
    %c0_63 = arith.constant 0 : index
    %260 = vector.load %arg6[%c0_62, %c0_63] : memref<1x8xf32, #tpu.memory_space<vmem>>, vector<1x8xf32>
    %261 = vector.broadcast %260 : vector<1x8xf32> to vector<8x8xf32>
    %262 = arith.addf %259, %261 : vector<8x8xf32>
    %cst_64 = arith.constant 0.000000e+00 : f32
    %263 = vector.broadcast %cst_64 : f32 to vector<8x8xf32>
    %264 = arith.maximumf %262, %263 : vector<8x8xf32>
    %265 = vector.extract_strided_slice %264 {offsets = [0, 0], sizes = [2, 8], strides = [1, 1]} : vector<8x8xf32> to vector<2x8xf32>
    %c0_65 = arith.constant 0 : index
    %c0_66 = arith.constant 0 : index
    %266 = vector.load %arg7[%c0_65, %c0_66] : memref<2x8xf32, #tpu.memory_space<vmem>>, vector<2x8xf32>
    tpu.vector_store %arg7[%c0_65, %c0_66], %265 {strides = array<i32>} : memref<2x8xf32, #tpu.memory_space<vmem>>, vector<2x8xf32>,
    return
  }
  func.func @transform_0(%arg0: i32) -> (i32, i32) {
    %c0_i32 = arith.constant 0 : i32
    %c0_i32_0 = arith.constant 0 : i32
    %c0_i32_1 = arith.constant 0 : i32
    return %c0_i32, %c0_i32_0 : i32, i32
  }
  func.func @transform_1(%arg0: i32) -> (i32, i32) {
    %c0_i32 = arith.constant 0 : i32
    %c0_i32_0 = arith.constant 0 : i32
    %c0_i32_1 = arith.constant 0 : i32
    return %c0_i32, %c0_i32_0 : i32, i32
  }
  func.func @transform_2(%arg0: i32) -> (i32, i32) {
    %c0_i32 = arith.constant 0 : i32
    %c0_i32_0 = arith.constant 0 : i32
    %c0_i32_1 = arith.constant 0 : i32
    return %c0_i32, %c0_i32_0 : i32, i32
  }
  func.func @transform_3(%arg0: i32) -> (i32, i32) {
    %c0_i32 = arith.constant 0 : i32
    %c0_i32_0 = arith.constant 0 : i32
    %c0_i32_1 = arith.constant 0 : i32
    return %c0_i32, %c0_i32_0 : i32, i32
  }
  func.func @transform_4(%arg0: i32) -> (i32, i32) {
    %c0_i32 = arith.constant 0 : i32
    %c0_i32_0 = arith.constant 0 : i32
    %c0_i32_1 = arith.constant 0 : i32
    return %c0_i32, %c0_i32_0 : i32, i32
  }
  func.func @transform_5(%arg0: i32) -> (i32, i32) {
    %c0_i32 = arith.constant 0 : i32
    %c0_i32_0 = arith.constant 0 : i32
    %c0_i32_1 = arith.constant 0 : i32
    return %c0_i32, %c0_i32_0 : i32, i32
  }
  func.func @transform_6(%arg0: i32) -> (i32, i32) {
    %c0_i32 = arith.constant 0 : i32
    %c0_i32_0 = arith.constant 0 : i32
    %c0_i32_1 = arith.constant 0 : i32
    return %c0_i32, %c0_i32_0 : i32, i32
  }
}

</mosaic_0001>

<llo_original>
// kernel: tpu_custom_call.1
$region0: #{tpu_custom_call.1}
  #allocation0 [shape = 'u32[]', space=smem, size = 0x4, offset = 0x4, fixed_abs, tag = 'smem constant byte address 0x4 - core index']
  #allocation1 [shape = 'u32[72,128]{1,0:T(1,128)}', space=vmem, size = 0x9000, scoped, tag = 'internal scratch']
  #allocation2 [shape = 'f32[64,128]{1,0:T(8,128)}', space=vmem, size = 0x8000, scoped, tag = 'scratch operand']
  %s0 = inlined_call_operand.vmem [shape: f32[64,16], index: 0, kind: input, shape index: {}]
  %s1 = inlined_call_operand.vmem [shape: f32[16,128], index: 1, kind: input, shape index: {}]
  %s2 = inlined_call_operand.vmem [shape: f32[32,128], index: 2, kind: input, shape index: {}]
  %s3 = inlined_call_operand.vmem [shape: f32[1,128], index: 3, kind: input, shape index: {}]
  %s4 = inlined_call_operand.vmem [shape: f32[32,8], index: 4, kind: input, shape index: {}]
  %s5 = inlined_call_operand.vmem [shape: f32[1,8], index: 5, kind: input, shape index: {}]
  %s6 = inlined_call_operand.hbm [shape: f32[2,8], index: 6, kind: output, shape index: {}]
  %s7 = sld [smem:[#allocation0]]
  $region34: #{tpu_custom_call.1} parent=0
    _
  %s9 = ssub.s32 1, %s7
  %s10 = scalar_select 0, %s9, %s7
  $region1: #{tpu_custom_call.1} parent=0
    #allocation3 [shape = 'u8[1024]{0}', space=vmem, size = 0x400, scoped, tag = 'output window, operand 0, single buffered']
    #allocation4 [shape = 's32[1]{0}', space=sflag, size = 0x4, scoped, tag = 'scoped memory for tpu_custom_call.1']
    %11 = vsyncpa [#allocation4], 0
    // Predicated region
    $region2: #{tpu_custom_call.1} parent=1 // pred_check
      _
    $region3: #{tpu_custom_call.1} parent=1 // pred_check_branch
      %13 = sbr.rel (0) target = $region5
    $region4: #{tpu_custom_call.1} parent=1 // pred_region
      _
    $region5: #{tpu_custom_call.1} parent=1 // pred_fallthru
      _
    // Predicated region
    $region6: #{tpu_custom_call.1} parent=1 // pred_check
      _
    $region7: #{tpu_custom_call.1} parent=1 // pred_check_branch
      %15 = sbr.rel (0) target = $region9
    $region8: #{tpu_custom_call.1} parent=1 // pred_region
      _
    $region9: #{tpu_custom_call.1} parent=1 // pred_fallthru
      _
    // Predicated region
    $region10: #{tpu_custom_call.1} parent=1 // pred_check
      _
    $region11: #{tpu_custom_call.1} parent=1 // pred_check_branch
      %17 = sbr.rel (0) target = $region13
    $region12: #{tpu_custom_call.1} parent=1 // pred_region
      _
    $region13: #{tpu_custom_call.1} parent=1 // pred_fallthru
      _
    // Predicated region
    $region14: #{tpu_custom_call.1} parent=1 // pred_check
      _
    $region15: #{tpu_custom_call.1} parent=1 // pred_check_branch
      %19 = sbr.rel (0) target = $region17
    $region16: #{tpu_custom_call.1} parent=1 // pred_region
      _
    $region17: #{tpu_custom_call.1} parent=1 // pred_fallthru
      _
    // Predicated region
    $region18: #{tpu_custom_call.1} parent=1 // pred_check
      _
    $region19: #{tpu_custom_call.1} parent=1 // pred_check_branch
      %21 = sbr.rel (0) target = $region21
    $region20: #{tpu_custom_call.1} parent=1 // pred_region
      _
    $region21: #{tpu_custom_call.1} parent=1 // pred_fallthru
      _
    // Predicated region
    $region22: #{tpu_custom_call.1} parent=1 // pred_check
      _
    $region23: #{tpu_custom_call.1} parent=1 // pred_check_branch
      %23 = sbr.rel (0) target = $region25
    $region24: #{tpu_custom_call.1} parent=1 // pred_region
      _
    $region25: #{tpu_custom_call.1} parent=1 // pred_fallthru
      _
    %v24 = vld [vmem:[%s0] sm:$0xff]
    %v25 = vld [vmem:[%s0 + $0x8] sm:$0xff]
    %v26 = vld [vmem:[%s0 + $0x10] sm:$0xff]
    %v27 = vld [vmem:[%s0 + $0x18] sm:$0xff]
    %v28 = vld [vmem:[%s0 + $0x20] sm:$0xff]
    %v29 = vld [vmem:[%s0 + $0x28] sm:$0xff]
    %v30 = vld [vmem:[%s0 + $0x30] sm:$0xff]
    %v31 = vld [vmem:[%s0 + $0x38] sm:$0xff]
    %v32 = vld [vmem:[%s1] sm:$0xff]
    %v33 = vld [vmem:[%s1 + $0x8] sm:$0xff]
    %v34 = vld [vmem:[%s3] sm:$0x1]
    %v36 = vperm.slane %v34, 0
    %vm38 = vcmask 130048
    %v40 = vsel %vm38, %v24, 0
    %v43 = vsel %vm38, %v25, 0
    %v46 = vsel %vm38, %v26, 0
    %v49 = vsel %vm38, %v27, 0
    %v52 = vsel %vm38, %v28, 0
    %v55 = vsel %vm38, %v29, 0
    %v58 = vsel %vm38, %v30, 0
    %v61 = vsel %vm38, %v31, 0
    %63 = vmatpush.msra.mxu0 0.0
    %64 = vmatpush.msra.mxu0 0.0
    %65 = vmatpush.msra.mxu0 0.0
    %66 = vmatpush.msra.mxu0 0.0
    %67 = vmatpush.msra.mxu0 0.0
    %68 = vmatpush.msra.mxu0 0.0
    %69 = vmatpush.msra.mxu0 0.0
    %70 = vmatpush.msra.mxu0 0.0
    %71 = vmatpush.msra.mxu0 0.0
    %72 = vmatpush.msra.mxu0 0.0
    %73 = vmatpush.msra.mxu0 0.0
    %74 = vmatpush.msra.mxu0 0.0
    %75 = vmatpush.msra.mxu0 0.0
    %76 = vmatpush.msra.mxu0 0.0
    %77 = vmatpush.msra.mxu0 %v33
    %78 = vmatpush.msra.mxu0 %v32
    %79 = vmatmul.f32.gmra.mxu0 %v40
    %v80 = vpop.f32.mrf.mxu0
    %v81 = vadd.f32 %v36, %v80
    %82 = vmatmul.f32.gmra.mxu0 %v43
    %v83 = vpop.f32.mrf.mxu0
    %v84 = vadd.f32 %v36, %v83
    %85 = vmatmul.f32.gmra.mxu0 %v46
    %v86 = vpop.f32.mrf.mxu0
    %v87 = vadd.f32 %v36, %v86
    %88 = vmatmul.f32.gmra.mxu0 %v49
    %v89 = vpop.f32.mrf.mxu0
    %v90 = vadd.f32 %v36, %v89
    %91 = vmatmul.f32.gmra.mxu0 %v52
    %v92 = vpop.f32.mrf.mxu0
    %v93 = vadd.f32 %v36, %v92
    %94 = vmatmul.f32.gmra.mxu0 %v55
    %v95 = vpop.f32.mrf.mxu0
    %v96 = vadd.f32 %v36, %v95
    %97 = vmatmul.f32.gmra.mxu0 %v58
    %v98 = vpop.f32.mrf.mxu0
    %v99 = vadd.f32 %v36, %v98
    %100 = vmatmul.f32.gmra.mxu0 %v61
    %v101 = vpop.f32.mrf.mxu0
    %v102 = vadd.f32 %v36, %v101
    %103 = vdwg.mxu0
    %104 = vst [vmem:[#allocation2] sm:$0xff] %v81
    %105 = vst [vmem:[#allocation2 + $0x8] sm:$0xff] %v84
    %106 = vst [vmem:[#allocation2 + $0x10] sm:$0xff] %v87
    %107 = vst [vmem:[#allocation2 + $0x18] sm:$0xff] %v90
    %108 = vst [vmem:[#allocation2 + $0x20] sm:$0xff] %v93
    %109 = vst [vmem:[#allocation2 + $0x28] sm:$0xff] %v96
    %110 = vst [vmem:[#allocation2 + $0x30] sm:$0xff] %v99
    %111 = vst [vmem:[#allocation2 + $0x38] sm:$0xff] %v102
    %v112 = vld [vmem:[%s2] sm:$0xff]
    %v113 = vld [vmem:[%s2 + $0x8] sm:$0xff]
    %v114 = vld [vmem:[%s2 + $0x10] sm:$0xff]
    %v115 = vld [vmem:[%s2 + $0x18] sm:$0xff]
    %v116 = vld [vmem:[#allocation2] sm:$0xff]
    %vm117 = vcmask 261120
    %v119 = vsel %vm117, 0.0, 0
    %121 = vmatpush.msra.mxu0 0.0
    %122 = vmatpush.msra.mxu0 0.0
    %123 = vmatpush.msra.mxu0 0.0
    %124 = vmatpush.msra.mxu0 0.0
    %125 = vmatpush.msra.mxu0 0.0
    %126 = vmatpush.msra.mxu0 0.0
    %127 = vmatpush.msra.mxu0 0.0
    %128 = vmatpush.msra.mxu0 0.0
    %129 = vmatpush.msra.mxu0 0.0
    %130 = vmatpush.msra.mxu0 0.0
    %131 = vmatpush.msra.mxu0 0.0
    %132 = vmatpush.msra.mxu0 0.0
    %133 = vmatpush.msra.mxu0 %v115
    %134 = vmatpush.msra.mxu0 %v114
    %135 = vmatpush.msra.mxu0 %v113
    %136 = vmatpush.msra.mxu0 %v112
    %137 = vmatmul.f32.gmra.mxu0 %v119
    %v138 = vpop.f32.mrf.mxu0
    %v139 = vadd.f32 0.0, %v138
    %140 = vdwg.mxu0
    %v141 = vadd.f32 %v116, %v139
    %v142 = vxor.u32 %v141, 2147483648
    %v143 = vmul.f32 %v142, 1.442695
    %v144 = vpow.pop %v143
    %v145 = vadd.f32 %v144, 1.0
    %v146 = vrcp.pop %v145
    %v147 = vmul.f32 %v145, %v146
    %v148 = vsub.f32 1.0, %v147
    %v149 = vmul.f32 %v146, %v148
    %v150 = vadd.f32 %v146, %v149
    %vm151 = vweird.f32 %v145
    %vm152 = vweird.f32 %v146
    %vm153 = vmor %vm151, %vm152
    %v154 = vsel %vm153, %v146, %v150
    %v155 = vand.u32 2147483647, %v145
    %vm156 = vcmp.eq.f32.partialorder %v155, 8.507059e+37
    %v157 = vand.u32 %v145, 2147483648
    %v158 = vor.u32 1.1754944e-38, %v157
    %v159 = vsel %vm156, %v158, %v154
    %v160 = vmul.f32 1.0, %v159
    %v161 = vtanh.pop %v141
    %v162 = vmul.f32 %v160, 0.0
    %164 = vrot.lane.b32.xlu0 %v161, 64
    %v165 = vpop.permute.xlu0 %164
    %v167 = vmul.f32 %v160, %v165
    %169 = vrot.lane.b32.xlu0 %v167, 32
    %v170 = vpop.permute.xlu0 %169
    %v172 = vadd.f32 %v162, %v170
    %v173 = vtanh.pop %v172
    %175 = vrot.lane.b32.xlu0 %v173, 64
    %v176 = vpop.permute.xlu0 %175
    %v178 = vmul.f32 %v160, %v176
    %s179 = scalar_lea.vmem [#allocation2], 8
    %v180 = vld [vmem:[%s179] sm:$0xff]
    %182 = vrot.lane.b32.xlu0 %v178, 32
    %v183 = vpop.permute.xlu0 %182
    %v184 = vsel %vm117, %v183, 0
    %186 = vmatpush.msra.mxu0 0.0
    %187 = vmatpush.msra.mxu0 0.0
    %188 = vmatpush.msra.mxu0 0.0
    %189 = vmatpush.msra.mxu0 0.0
    %190 = vmatpush.msra.mxu0 0.0
    %191 = vmatpush.msra.mxu0 0.0
    %192 = vmatpush.msra.mxu0 0.0
    %193 = vmatpush.msra.mxu0 0.0
    %194 = vmatpush.msra.mxu0 0.0
    %195 = vmatpush.msra.mxu0 0.0
    %196 = vmatpush.msra.mxu0 0.0
    %197 = vmatpush.msra.mxu0 0.0
    %198 = vmatpush.msra.mxu0 %v115
    %199 = vmatpush.msra.mxu0 %v114
    %200 = vmatpush.msra.mxu0 %v113
    %201 = vmatpush.msra.mxu0 %v112
    %202 = vmatmul.f32.gmra.mxu0 %v184
    %v203 = vpop.f32.mrf.mxu0
    %v204 = vadd.f32 0.0, %v203
    %205 = vdwg.mxu0
    %v206 = vadd.f32 %v180, %v204
    %v207 = vxor.u32 %v206, 2147483648
    %v208 = vmul.f32 %v207, 1.442695
    %v209 = vpow.pop %v208
    %v210 = vadd.f32 %v209, 1.0
    %v211 = vrcp.pop %v210
    %v212 = vmul.f32 %v210, %v211
    %v213 = vsub.f32 1.0, %v212
    %v214 = vmul.f32 %v211, %v213
    %v215 = vadd.f32 %v211, %v214
    %vm216 = vweird.f32 %v210
    %vm217 = vweird.f32 %v211
    %vm218 = vmor %vm216, %vm217
    %v219 = vsel %vm218, %v211, %v215
    %v220 = vand.u32 2147483647, %v210
    %vm221 = vcmp.eq.f32.partialorder %v220, 8.507059e+37
    %v222 = vand.u32 %v210, 2147483648
    %v223 = vor.u32 1.1754944e-38, %v222
    %v224 = vsel %vm221, %v223, %v219
    %v225 = vmul.f32 1.0, %v224
    %v226 = vtanh.pop %v206
    %v227 = vmul.f32 %v225, %v172
    %229 = vrot.lane.b32.xlu0 %v226, 64
    %v230 = vpop.permute.xlu0 %229
    %v232 = vmul.f32 %v225, %v230
    %234 = vrot.lane.b32.xlu0 %v232, 32
    %v235 = vpop.permute.xlu0 %234
    %v237 = vadd.f32 %v227, %v235
    %v238 = vtanh.pop %v237
    %240 = vrot.lane.b32.xlu0 %v238, 64
    %v241 = vpop.permute.xlu0 %240
    %v243 = vmul.f32 %v225, %v241
    %s244 = scalar_lea.vmem [#allocation2], 16
    %v245 = vld [vmem:[%s244] sm:$0xff]
    %247 = vrot.lane.b32.xlu0 %v243, 32
    %v248 = vpop.permute.xlu0 %247
    %v249 = vsel %vm117, %v248, 0
    %251 = vmatpush.msra.mxu0 0.0
    %252 = vmatpush.msra.mxu0 0.0
    %253 = vmatpush.msra.mxu0 0.0
    %254 = vmatpush.msra.mxu0 0.0
    %255 = vmatpush.msra.mxu0 0.0
    %256 = vmatpush.msra.mxu0 0.0
    %257 = vmatpush.msra.mxu0 0.0
    %258 = vmatpush.msra.mxu0 0.0
    %259 = vmatpush.msra.mxu0 0.0
    %260 = vmatpush.msra.mxu0 0.0
    %261 = vmatpush.msra.mxu0 0.0
    %262 = vmatpush.msra.mxu0 0.0
    %263 = vmatpush.msra.mxu0 %v115
    %264 = vmatpush.msra.mxu0 %v114
    %265 = vmatpush.msra.mxu0 %v113
    %266 = vmatpush.msra.mxu0 %v112
    %267 = vmatmul.f32.gmra.mxu0 %v249
    %v268 = vpop.f32.mrf.mxu0
    %v269 = vadd.f32 0.0, %v268
    %270 = vdwg.mxu0
    %v271 = vadd.f32 %v245, %v269
    %v272 = vxor.u32 %v271, 2147483648
    %v273 = vmul.f32 %v272, 1.442695
    %v274 = vpow.pop %v273
    %v275 = vadd.f32 %v274, 1.0
    %v276 = vrcp.pop %v275
    %v277 = vmul.f32 %v275, %v276
    %v278 = vsub.f32 1.0, %v277
    %v279 = vmul.f32 %v276, %v278
    %v280 = vadd.f32 %v276, %v279
    %vm281 = vweird.f32 %v275
    %vm282 = vweird.f32 %v276
    %vm283 = vmor %vm281, %vm282
    %v284 = vsel %vm283, %v276, %v280
    %v285 = vand.u32 2147483647, %v275
    %vm286 = vcmp.eq.f32.partialorder %v285, 8.507059e+37
    %v287 = vand.u32 %v275, 2147483648
    %v288 = vor.u32 1.1754944e-38, %v287
    %v289 = vsel %vm286, %v288, %v284
    %v290 = vmul.f32 1.0, %v289
    %v291 = vtanh.pop %v271
    %v292 = vmul.f32 %v290, %v237
    %294 = vrot.lane.b32.xlu0 %v291, 64
    %v295 = vpop.permute.xlu0 %294
    %v297 = vmul.f32 %v290, %v295
    %299 = vrot.lane.b32.xlu0 %v297, 32
    %v300 = vpop.permute.xlu0 %299
    %v302 = vadd.f32 %v292, %v300
    %v303 = vtanh.pop %v302
    %305 = vrot.lane.b32.xlu0 %v303, 64
    %v306 = vpop.permute.xlu0 %305
    %v308 = vmul.f32 %v290, %v306
    %s309 = scalar_lea.vmem [#allocation2], 24
    %v310 = vld [vmem:[%s309] sm:$0xff]
    %312 = vrot.lane.b32.xlu0 %v308, 32
    %v313 = vpop.permute.xlu0 %312
    %v314 = vsel %vm117, %v313, 0
    %316 = vmatpush.msra.mxu0 0.0
    %317 = vmatpush.msra.mxu0 0.0
    %318 = vmatpush.msra.mxu0 0.0
    %319 = vmatpush.msra.mxu0 0.0
    %320 = vmatpush.msra.mxu0 0.0
    %321 = vmatpush.msra.mxu0 0.0
    %322 = vmatpush.msra.mxu0 0.0
    %323 = vmatpush.msra.mxu0 0.0
    %324 = vmatpush.msra.mxu0 0.0
    %325 = vmatpush.msra.mxu0 0.0
    %326 = vmatpush.msra.mxu0 0.0
    %327 = vmatpush.msra.mxu0 0.0
    %328 = vmatpush.msra.mxu0 %v115
    %329 = vmatpush.msra.mxu0 %v114
    %330 = vmatpush.msra.mxu0 %v113
    %331 = vmatpush.msra.mxu0 %v112
    %332 = vmatmul.f32.gmra.mxu0 %v314
    %v333 = vpop.f32.mrf.mxu0
    %v334 = vadd.f32 0.0, %v333
    %335 = vdwg.mxu0
    %v336 = vadd.f32 %v310, %v334
    %v337 = vxor.u32 %v336, 2147483648
    %v338 = vmul.f32 %v337, 1.442695
    %v339 = vpow.pop %v338
    %v340 = vadd.f32 %v339, 1.0
    %v341 = vrcp.pop %v340
    %v342 = vmul.f32 %v340, %v341
    %v343 = vsub.f32 1.0, %v342
    %v344 = vmul.f32 %v341, %v343
    %v345 = vadd.f32 %v341, %v344
    %vm346 = vweird.f32 %v340
    %vm347 = vweird.f32 %v341
    %vm348 = vmor %vm346, %vm347
    %v349 = vsel %vm348, %v341, %v345
    %v350 = vand.u32 2147483647, %v340
    %vm351 = vcmp.eq.f32.partialorder %v350, 8.507059e+37
    %v352 = vand.u32 %v340, 2147483648
    %v353 = vor.u32 1.1754944e-38, %v352
    %v354 = vsel %vm351, %v353, %v349
    %v355 = vmul.f32 1.0, %v354
    %v356 = vtanh.pop %v336
    %v357 = vmul.f32 %v355, %v302
    %359 = vrot.lane.b32.xlu0 %v356, 64
    %v360 = vpop.permute.xlu0 %359
    %v362 = vmul.f32 %v355, %v360
    %364 = vrot.lane.b32.xlu0 %v362, 32
    %v365 = vpop.permute.xlu0 %364
    %v367 = vadd.f32 %v357, %v365
    %v368 = vtanh.pop %v367
    %370 = vrot.lane.b32.xlu0 %v368, 64
    %v371 = vpop.permute.xlu0 %370
    %v373 = vmul.f32 %v355, %v371
    %s374 = scalar_lea.vmem [#allocation2], 32
    %v375 = vld [vmem:[%s374] sm:$0xff]
    %377 = vrot.lane.b32.xlu0 %v373, 32
    %v378 = vpop.permute.xlu0 %377
    %v379 = vsel %vm117, %v378, 0
    %381 = vmatpush.msra.mxu0 0.0
    %382 = vmatpush.msra.mxu0 0.0
    %383 = vmatpush.msra.mxu0 0.0
    %384 = vmatpush.msra.mxu0 0.0
    %385 = vmatpush.msra.mxu0 0.0
    %386 = vmatpush.msra.mxu0 0.0
    %387 = vmatpush.msra.mxu0 0.0
    %388 = vmatpush.msra.mxu0 0.0
    %389 = vmatpush.msra.mxu0 0.0
    %390 = vmatpush.msra.mxu0 0.0
    %391 = vmatpush.msra.mxu0 0.0
    %392 = vmatpush.msra.mxu0 0.0
    %393 = vmatpush.msra.mxu0 %v115
    %394 = vmatpush.msra.mxu0 %v114
    %395 = vmatpush.msra.mxu0 %v113
    %396 = vmatpush.msra.mxu0 %v112
    %397 = vmatmul.f32.gmra.mxu0 %v379
    %v398 = vpop.f32.mrf.mxu0
    %v399 = vadd.f32 0.0, %v398
    %400 = vdwg.mxu0
    %v401 = vadd.f32 %v375, %v399
    %v402 = vxor.u32 %v401, 2147483648
    %v403 = vmul.f32 %v402, 1.442695
    %v404 = vpow.pop %v403
    %v405 = vadd.f32 %v404, 1.0
    %v406 = vrcp.pop %v405
    %v407 = vmul.f32 %v405, %v406
    %v408 = vsub.f32 1.0, %v407
    %v409 = vmul.f32 %v406, %v408
    %v410 = vadd.f32 %v406, %v409
    %vm411 = vweird.f32 %v405
    %vm412 = vweird.f32 %v406
    %vm413 = vmor %vm411, %vm412
    %v414 = vsel %vm413, %v406, %v410
    %v415 = vand.u32 2147483647, %v405
    %vm416 = vcmp.eq.f32.partialorder %v415, 8.507059e+37
    %v417 = vand.u32 %v405, 2147483648
    %v418 = vor.u32 1.1754944e-38, %v417
    %v419 = vsel %vm416, %v418, %v414
    %v420 = vmul.f32 1.0, %v419
    %v421 = vtanh.pop %v401
    %v422 = vmul.f32 %v420, %v367
    %424 = vrot.lane.b32.xlu0 %v421, 64
    %v425 = vpop.permute.xlu0 %424
    %v427 = vmul.f32 %v420, %v425
    %429 = vrot.lane.b32.xlu0 %v427, 32
    %v430 = vpop.permute.xlu0 %429
    %v432 = vadd.f32 %v422, %v430
    %v433 = vtanh.pop %v432
    %435 = vrot.lane.b32.xlu0 %v433, 64
    %v436 = vpop.permute.xlu0 %435
    %v438 = vmul.f32 %v420, %v436
    %s439 = scalar_lea.vmem [#allocation2], 40
    %v440 = vld [vmem:[%s439] sm:$0xff]
    %442 = vrot.lane.b32.xlu0 %v438, 32
    %v443 = vpop.permute.xlu0 %442
    %v444 = vsel %vm117, %v443, 0
    %446 = vmatpush.msra.mxu0 0.0
    %447 = vmatpush.msra.mxu0 0.0
    %448 = vmatpush.msra.mxu0 0.0
    %449 = vmatpush.msra.mxu0 0.0
    %450 = vmatpush.msra.mxu0 0.0
    %451 = vmatpush.msra.mxu0 0.0
    %452 = vmatpush.msra.mxu0 0.0
    %453 = vmatpush.msra.mxu0 0.0
    %454 = vmatpush.msra.mxu0 0.0
    %455 = vmatpush.msra.mxu0 0.0
    %456 = vmatpush.msra.mxu0 0.0
    %457 = vmatpush.msra.mxu0 0.0
    %458 = vmatpush.msra.mxu0 %v115
    %459 = vmatpush.msra.mxu0 %v114
    %460 = vmatpush.msra.mxu0 %v113
    %461 = vmatpush.msra.mxu0 %v112
    %462 = vmatmul.f32.gmra.mxu0 %v444
    %v463 = vpop.f32.mrf.mxu0
    %v464 = vadd.f32 0.0, %v463
    %465 = vdwg.mxu0
    %v466 = vadd.f32 %v440, %v464
    %v467 = vxor.u32 %v466, 2147483648
    %v468 = vmul.f32 %v467, 1.442695
    %v469 = vpow.pop %v468
    %v470 = vadd.f32 %v469, 1.0
    %v471 = vrcp.pop %v470
    %v472 = vmul.f32 %v470, %v471
    %v473 = vsub.f32 1.0, %v472
    %v474 = vmul.f32 %v471, %v473
    %v475 = vadd.f32 %v471, %v474
    %vm476 = vweird.f32 %v470
    %vm477 = vweird.f32 %v471
    %vm478 = vmor %vm476, %vm477
    %v479 = vsel %vm478, %v471, %v475
    %v480 = vand.u32 2147483647, %v470
    %vm481 = vcmp.eq.f32.partialorder %v480, 8.507059e+37
    %v482 = vand.u32 %v470, 2147483648
    %v483 = vor.u32 1.1754944e-38, %v482
    %v484 = vsel %vm481, %v483, %v479
    %v485 = vmul.f32 1.0, %v484
    %v486 = vtanh.pop %v466
    %v487 = vmul.f32 %v485, %v432
    %489 = vrot.lane.b32.xlu0 %v486, 64
    %v490 = vpop.permute.xlu0 %489
    %v492 = vmul.f32 %v485, %v490
    %494 = vrot.lane.b32.xlu0 %v492, 32
    %v495 = vpop.permute.xlu0 %494
    %v497 = vadd.f32 %v487, %v495
    %v498 = vtanh.pop %v497
    %500 = vrot.lane.b32.xlu0 %v498, 64
    %v501 = vpop.permute.xlu0 %500
    %v503 = vmul.f32 %v485, %v501
    %s504 = scalar_lea.vmem [#allocation2], 48
    %v505 = vld [vmem:[%s504] sm:$0xff]
    %507 = vrot.lane.b32.xlu0 %v503, 32
    %v508 = vpop.permute.xlu0 %507
    %v509 = vsel %vm117, %v508, 0
    %511 = vmatpush.msra.mxu0 0.0
    %512 = vmatpush.msra.mxu0 0.0
    %513 = vmatpush.msra.mxu0 0.0
    %514 = vmatpush.msra.mxu0 0.0
    %515 = vmatpush.msra.mxu0 0.0
    %516 = vmatpush.msra.mxu0 0.0
    %517 = vmatpush.msra.mxu0 0.0
    %518 = vmatpush.msra.mxu0 0.0
    %519 = vmatpush.msra.mxu0 0.0
    %520 = vmatpush.msra.mxu0 0.0
    %521 = vmatpush.msra.mxu0 0.0
    %522 = vmatpush.msra.mxu0 0.0
    %523 = vmatpush.msra.mxu0 %v115
    %524 = vmatpush.msra.mxu0 %v114
    %525 = vmatpush.msra.mxu0 %v113
    %526 = vmatpush.msra.mxu0 %v112
    %527 = vmatmul.f32.gmra.mxu0 %v509
    %v528 = vpop.f32.mrf.mxu0
    %v529 = vadd.f32 0.0, %v528
    %530 = vdwg.mxu0
    %v531 = vadd.f32 %v505, %v529
    %v532 = vxor.u32 %v531, 2147483648
    %v533 = vmul.f32 %v532, 1.442695
    %v534 = vpow.pop %v533
    %v535 = vadd.f32 %v534, 1.0
    %v536 = vrcp.pop %v535
    %v537 = vmul.f32 %v535, %v536
    %v538 = vsub.f32 1.0, %v537
    %v539 = vmul.f32 %v536, %v538
    %v540 = vadd.f32 %v536, %v539
    %vm541 = vweird.f32 %v535
    %vm542 = vweird.f32 %v536
    %vm543 = vmor %vm541, %vm542
    %v544 = vsel %vm543, %v536, %v540
    %v545 = vand.u32 2147483647, %v535
    %vm546 = vcmp.eq.f32.partialorder %v545, 8.507059e+37
    %v547 = vand.u32 %v535, 2147483648
    %v548 = vor.u32 1.1754944e-38, %v547
    %v549 = vsel %vm546, %v548, %v544
    %v550 = vmul.f32 1.0, %v549
    %v551 = vtanh.pop %v531
    %v552 = vmul.f32 %v550, %v497
    %554 = vrot.lane.b32.xlu0 %v551, 64
    %v555 = vpop.permute.xlu0 %554
    %v557 = vmul.f32 %v550, %v555
    %559 = vrot.lane.b32.xlu0 %v557, 32
    %v560 = vpop.permute.xlu0 %559
    %v562 = vadd.f32 %v552, %v560
    %v563 = vtanh.pop %v562
    %565 = vrot.lane.b32.xlu0 %v563, 64
    %v566 = vpop.permute.xlu0 %565
    %v568 = vmul.f32 %v550, %v566
    %s569 = scalar_lea.vmem [#allocation2], 56
    %v570 = vld [vmem:[%s569] sm:$0xff]
    %572 = vrot.lane.b32.xlu0 %v568, 32
    %v573 = vpop.permute.xlu0 %572
    %v574 = vsel %vm117, %v573, 0
    %576 = vmatpush.msra.mxu0 0.0
    %577 = vmatpush.msra.mxu0 0.0
    %578 = vmatpush.msra.mxu0 0.0
    %579 = vmatpush.msra.mxu0 0.0
    %580 = vmatpush.msra.mxu0 0.0
    %581 = vmatpush.msra.mxu0 0.0
    %582 = vmatpush.msra.mxu0 0.0
    %583 = vmatpush.msra.mxu0 0.0
    %584 = vmatpush.msra.mxu0 0.0
    %585 = vmatpush.msra.mxu0 0.0
    %586 = vmatpush.msra.mxu0 0.0
    %587 = vmatpush.msra.mxu0 0.0
    %588 = vmatpush.msra.mxu0 %v115
    %589 = vmatpush.msra.mxu0 %v114
    %590 = vmatpush.msra.mxu0 %v113
    %591 = vmatpush.msra.mxu0 %v112
    %592 = vmatmul.f32.gmra.mxu0 %v574
    %v593 = vpop.f32.mrf.mxu0
    %v594 = vadd.f32 0.0, %v593
    %595 = vdwg.mxu0
    %v596 = vadd.f32 %v570, %v594
    %v597 = vxor.u32 %v596, 2147483648
    %v598 = vmul.f32 %v597, 1.442695
    %v599 = vpow.pop %v598
    %v600 = vadd.f32 %v599, 1.0
    %v601 = vrcp.pop %v600
    %v602 = vmul.f32 %v600, %v601
    %v603 = vsub.f32 1.0, %v602
    %v604 = vmul.f32 %v601, %v603
    %v605 = vadd.f32 %v601, %v604
    %vm606 = vweird.f32 %v600
    %vm607 = vweird.f32 %v601
    %vm608 = vmor %vm606, %vm607
    %v609 = vsel %vm608, %v601, %v605
    %v610 = vand.u32 2147483647, %v600
    %vm611 = vcmp.eq.f32.partialorder %v610, 8.507059e+37
    %v612 = vand.u32 %v600, 2147483648
    %v613 = vor.u32 1.1754944e-38, %v612
    %v614 = vsel %vm611, %v613, %v609
    %v615 = vmul.f32 1.0, %v614
    %v616 = vtanh.pop %v596
    %v617 = vmul.f32 %v615, %v562
    %619 = vrot.lane.b32.xlu0 %v616, 64
    %v620 = vpop.permute.xlu0 %619
    %v622 = vmul.f32 %v615, %v620
    %624 = vrot.lane.b32.xlu0 %v622, 32
    %v625 = vpop.permute.xlu0 %624
    %v627 = vadd.f32 %v617, %v625
    %v628 = vtanh.pop %v627
    %630 = vrot.lane.b32.xlu0 %v628, 64
    %v631 = vpop.permute.xlu0 %630
    %v633 = vmul.f32 %v615, %v631
    %v634 = vld [vmem:[%s4] sm:$0xff]
    %v635 = vld [vmem:[%s4 + $0x8] sm:$0xff]
    %v636 = vld [vmem:[%s4 + $0x10] sm:$0xff]
    %v637 = vld [vmem:[%s4 + $0x18] sm:$0xff]
    %v638 = vld [vmem:[%s5] sm:$0x1]
    %v640 = vperm.slane %v638, 0
    %643 = vrot.lane.b32.xlu0 %v633, 32
    %v644 = vpop.permute.xlu0 %643
    %v645 = vsel %vm117, %v644, 0
    %647 = vmatpush.msra.mxu0 0.0
    %648 = vmatpush.msra.mxu0 0.0
    %649 = vmatpush.msra.mxu0 0.0
    %650 = vmatpush.msra.mxu0 0.0
    %651 = vmatpush.msra.mxu0 0.0
    %652 = vmatpush.msra.mxu0 0.0
    %653 = vmatpush.msra.mxu0 0.0
    %654 = vmatpush.msra.mxu0 0.0
    %655 = vmatpush.msra.mxu0 0.0
    %656 = vmatpush.msra.mxu0 0.0
    %657 = vmatpush.msra.mxu0 0.0
    %658 = vmatpush.msra.mxu0 0.0
    %659 = vmatpush.msra.mxu0 %v637
    %660 = vmatpush.msra.mxu0 %v636
    %661 = vmatpush.msra.mxu0 %v635
    %662 = vmatpush.msra.mxu0 %v634
    %663 = vmatmul.f32.gmra.mxu0 %v645
    %v664 = vpop.f32.mrf.mxu0
    %v665 = vadd.f32 %v640, %v664
    %666 = vdwg.mxu0
    %v667 = vmax.f32 %v665, 0.0
    %vm668 = vcmask 58368
    %669 = vst.msk [vmem:[#allocation3] sm:$0x3] %vm668, %v667
    // Predicated region
    $region26: #{tpu_custom_call.1} parent=1 // pred_check
      _
    $region27: #{tpu_custom_call.1} parent=1 // pred_check_branch
      %671 = sbr.rel (0) target = $region29
    $region28: #{tpu_custom_call.1} parent=1 // pred_region
      %673 = vsyncadd [#allocation4], 0
      %s675 = sshll.u32 [#allocation3], 4
      %s676 = int_to_ptr.vmem [resolvable:$true] %s675
      %s677 = sshll.u32 %s6, 4
      %s678 = int_to_ptr.hbm [resolvable:$true] %s677
      %680 = dma.vmem_to_hbm [thread:$0]  %s676, 32, %s678, [#allocation4]
    $region29: #{tpu_custom_call.1} parent=1 // pred_fallthru
      _
    // Predicated region
    $region30: #{tpu_custom_call.1} parent=1 // pred_check
      _
    $region31: #{tpu_custom_call.1} parent=1 // pred_check_branch
      %682 = sbr.rel (0) target = $region33
    $region32: #{tpu_custom_call.1} parent=1 // pred_region
      %684 = dma.done [#allocation4], 32
    $region33: #{tpu_custom_call.1} parent=1 // pred_fallthru
      _
    %685 = vsyncpa [#allocation4], 1

</llo_original>
